<compile_context>
chip_gen: v7x
topology: tpu7x:2x2x1
jax: 0.10.0
libtpu: 0.0.40
codegen_flags: <defaults>
</compile_context>

<pallas_src>
import functools

import jax
import jax.numpy as jnp
from jax.experimental import pallas as pl
from jax.experimental.pallas import tpu as pltpu


def _fused_layernorm_kernel(x_ref, gammas_ref, betas_ref, o_ref, *,
                            eps, inv_hidden, n_layers):
    """Apply n_layers LayerNorms back-to-back on one VMEM-resident row tile."""
    io_dtype = x_ref.dtype
    x0 = x_ref[...].astype(jnp.float32)                  # (row_tile, hidden)

    def layer_body(l, x):
        # Two-pass centered variance (matches PyTorch LayerNorm numerics);
        # 1/hidden is a precomputed constant applied as a multiply.
        mean = jnp.sum(x, axis=-1, keepdims=True) * inv_hidden
        centered = x - mean
        var = jnp.sum(centered * centered, axis=-1, keepdims=True) * inv_hidden
        inv_std = jax.lax.rsqrt(var + eps)               # EUP slot, ~free here
        gamma = gammas_ref[pl.ds(l, 1), :].astype(jnp.float32)   # (1, hidden)
        beta = betas_ref[pl.ds(l, 1), :].astype(jnp.float32)     # (1, hidden)
        y = centered * inv_std * gamma + beta
        # Round-trip through the I/O dtype so fused numerics match the
        # unfused layer-by-layer execution exactly (no-op for f32 inputs).
        return y.astype(io_dtype).astype(jnp.float32)

    out = jax.lax.fori_loop(0, n_layers, layer_body, x0)
    o_ref[...] = out.astype(o_ref.dtype)


def _sublane_align(dtype):
    # Sub-32-bit dtypes pack rows along sublanes: keep row tiles aligned.
    itemsize = jnp.dtype(dtype).itemsize
    return {4: 8, 2: 16, 1: 32}.get(itemsize, 8)


def _vmem_capacity_bytes():
    # Generation-aware: 128 MiB on v5e/v6e, 64 MiB per TC on v7x.
    try:
        return int(pltpu.get_tpu_info().vmem_capacity_bytes)
    except Exception:
        return 64 * 1024 * 1024  # conservative fallback (v7x per-TC VMEM)


def fused_layer_norm_stack(x, gammas, betas, eps=1e-6, *, row_tile=1024):
    """Apply a stack of LayerNorms (gammas/betas shaped (L, hidden)) over the
    last axis of x with a single fused Pallas kernel."""
    # NOTE: PyTorch nn.LayerNorm defaults eps to 1e-5; the abstract
    # `layer(config)` in the spec leaves it to the config, so eps is a kwarg.
    orig_shape = x.shape
    hidden = orig_shape[-1]
    rows = 1
    for d in orig_shape[:-1]:
        rows *= d
    n_layers = int(gammas.shape[0])

    x2 = x.reshape(rows, hidden)
    gammas2 = gammas.reshape(n_layers, hidden)
    betas2 = betas.reshape(n_layers, hidden)

    itemsize = jnp.dtype(x.dtype).itemsize
    param_itemsize = jnp.dtype(gammas.dtype).itemsize
    align = _sublane_align(x.dtype)

    # VMEM sizing: request ~75% of physical VMEM as the scoped limit (leaves
    # compiler-scratch headroom, important on v7x's 64 MiB), and keep the
    # per-step footprint — double-buffered in/out tiles plus f32 working
    # copies (x_f32, centered, y) plus the resident param blocks — within
    # ~75% of that request.
    vmem_capacity = _vmem_capacity_bytes()
    vmem_limit = (vmem_capacity * 3) // 4
    param_bytes = 2 * 2 * n_layers * hidden * param_itemsize  # gammas+betas, dbl-buf
    tile_budget = max(0, (vmem_limit * 3) // 4 - param_bytes)
    bytes_per_row = hidden * (2 * 2 * itemsize + 4 * 4)
    max_rows_by_vmem = max(align, tile_budget // bytes_per_row)

    rows_aligned = ((rows + align - 1) // align) * align
    row_tile = min(int(row_tile), rows_aligned, int(max_rows_by_vmem))
    row_tile = max(align, (row_tile // align) * align)

    # Ragged last block: Pallas masks out-of-bounds rows on writeback, and
    # each row's statistics are independent, so no host-side padding needed.
    grid = (pl.cdiv(rows, row_tile),)

    kernel = functools.partial(
        _fused_layernorm_kernel,
        eps=float(eps),
        inv_hidden=1.0 / float(hidden),
        n_layers=n_layers,
    )

    cost = pl.CostEstimate(
        flops=8 * n_layers * rows * hidden,
        transcendentals=n_layers * rows,
        bytes_accessed=2 * rows * hidden * itemsize
        + 2 * n_layers * hidden * param_itemsize,
    )

    out = pl.pallas_call(
        kernel,
        out_shape=jax.ShapeDtypeStruct((rows, hidden), x.dtype),
        grid_spec=pltpu.PrefetchScalarGridSpec(
            num_scalar_prefetch=0,
            grid=grid,
            in_specs=[
                pl.BlockSpec((row_tile, hidden), lambda i: (i, 0)),
                pl.BlockSpec((n_layers, hidden), lambda i: (0, 0)),
                pl.BlockSpec((n_layers, hidden), lambda i: (0, 0)),
            ],
            out_specs=pl.BlockSpec((row_tile, hidden), lambda i: (i, 0)),
        ),
        compiler_params=pltpu.CompilerParams(
            # TODO(synk): on v7x, confirm in a profile that the row axis is
            # sharded across both TensorCores; if not, switch this axis to
            # pltpu.CORE_PARALLEL (or add an explicit 2-wide core grid axis).
            dimension_semantics=("parallel",),
            vmem_limit_bytes=int(vmem_limit),
        ),
        # x is read once and written once per row; let XLA reuse its buffer.
        input_output_aliases={0: 0},
        cost_estimate=cost,
    )(x2, gammas2, betas2)

    return out.reshape(orig_shape)


def model_block(x, layer_params, eps=1e-6):
    """ModelBlock.forward: run each layer in sequence, collecting per-layer
    attention outputs (empty here — the normalization layer returns only x).
    All layers are fused into a single Pallas call."""
    attention = []
    if not layer_params:
        return x, attention
    gammas = jnp.stack([g for g, _ in layer_params], axis=0)  # (L, hidden)
    betas = jnp.stack([b for _, b in layer_params], axis=0)   # (L, hidden)
    x = fused_layer_norm_stack(x, gammas, betas, eps=eps)
    # TODO(synk): the generic `layer(config)` in the PyTorch spec is abstract;
    # attention weights only exist for attention layers, so entries are empty.
    attention = [() for _ in layer_params]
    return x, attention


if __name__ == "__main__":
    batch, seq, hidden, n_layers = 2, 8, 32, 2
    key = jax.random.PRNGKey(0)
    kx, kg, kb = jax.random.split(key, 3)
    x = jax.random.normal(kx, (batch, seq, hidden), dtype=jnp.float32)

    # Use perturbed (deterministic) gamma/beta so per-layer parameter indexing
    # inside the fused kernel is actually exercised.
    g_noise = jax.random.normal(kg, (n_layers, hidden), dtype=jnp.float32)
    b_noise = jax.random.normal(kb, (n_layers, hidden), dtype=jnp.float32)
    layer_params = [
        (1.0 + 0.1 * g_noise[l], 0.05 * b_noise[l]) for l in range(n_layers)
    ]

    y, attention = model_block(x, layer_params, eps=1e-6)
    y = jax.block_until_ready(y)

    # Reference check in plain JAX (same math as the PyTorch forward).
    ref = x
    for gamma, beta in layer_params:
        mean = jnp.mean(ref, axis=-1, keepdims=True)
        var = jnp.mean((ref - mean) ** 2, axis=-1, keepdims=True)
        ref = (ref - mean) / jnp.sqrt(var + 1e-6) * gamma + beta

    assert jnp.allclose(y, ref, atol=1e-5, rtol=1e-5), "mismatch vs reference"
    assert len(attention) == n_layers

    print("KERNEL_OK")
</pallas_src>

<mosaic_0001>
module attributes {stable_mosaic.version = 11 : i64} {
  func.func @_fused_layernorm_kernel(%arg0: i32, %arg1: memref<16x32xf32, #tpu.memory_space<vmem>>, %arg2: memref<2x32xf32, #tpu.memory_space<vmem>>, %arg3: memref<2x32xf32, #tpu.memory_space<vmem>>, %arg4: memref<16x32xf32, #tpu.memory_space<vmem>>) attributes {dimension_semantics = [#tpu.dimension_semantics<parallel>], iteration_bounds = array<i64: 1>, scalar_prefetch = 0 : i64, scratch_operands = 0 : i64, tpu.core_type = #tpu.core_type<tc>, window_params = [{transform_indices = @transform_0, window_bounds = array<i64: 16, 32>}, {pipeline_mode = #tpu.pipeline_mode<synchronous>, transform_indices = @transform_1, window_bounds = array<i64: 2, 32>}, {pipeline_mode = #tpu.pipeline_mode<synchronous>, transform_indices = @transform_2, window_bounds = array<i64: 2, 32>}, {transform_indices = @transform_3, window_bounds = array<i64: 16, 32>}]} {
    %c0 = arith.constant 0 : index
    %c0_0 = arith.constant 0 : index
    %0 = vector.load %arg1[%c0, %c0_0] : memref<16x32xf32, #tpu.memory_space<vmem>>, vector<16x32xf32>
    %c0_i32 = arith.constant 0 : i32
    %c2_i32 = arith.constant 2 : i32
    %1 = arith.addi %c0_i32, %c2_i32 : i32
    %c1_i32 = arith.constant 1 : i32
    %2 = scf.for %arg5 = %c0_i32 to %1 step %c1_i32 iter_args(%arg6 = %0) -> (vector<16x32xf32>)  : i32 {
      %cst = arith.constant dense<0.000000e+00> : vector<16xf32>
      %4 = vector.multi_reduction <add>, %arg6, %cst [1] : vector<16x32xf32> to vector<16xf32>
      %5 = vector.shape_cast %4 : vector<16xf32> to vector<16x1xf32>
      %cst_4 = arith.constant 3.125000e-02 : f32
      %6 = vector.broadcast %cst_4 : f32 to vector<16x1xf32>
      %7 = arith.mulf %5, %6 : vector<16x1xf32>
      %8 = vector.broadcast %7 : vector<16x1xf32> to vector<16x32xf32>
      %9 = arith.subf %arg6, %8 : vector<16x32xf32>
      %10 = arith.mulf %9, %9 : vector<16x32xf32>
      %cst_5 = arith.constant dense<0.000000e+00> : vector<16xf32>
      %11 = vector.multi_reduction <add>, %10, %cst_5 [1] : vector<16x32xf32> to vector<16xf32>
      %12 = vector.shape_cast %11 : vector<16xf32> to vector<16x1xf32>
      %cst_6 = arith.constant 3.125000e-02 : f32
      %13 = vector.broadcast %cst_6 : f32 to vector<16x1xf32>
      %14 = arith.mulf %12, %13 : vector<16x1xf32>
      %cst_7 = arith.constant 9.99999997E-7 : f32
      %15 = vector.broadcast %cst_7 : f32 to vector<16x1xf32>
      %16 = arith.addf %14, %15 : vector<16x1xf32>
      %17 = math.rsqrt %16 : vector<16x1xf32>
      %18 = arith.index_cast %arg5 : i32 to index
      %c0_8 = arith.constant 0 : index
      %19 = vector.load %arg2[%18, %c0_8] : memref<2x32xf32, #tpu.memory_space<vmem>>, vector<1x32xf32>
      %20 = arith.index_cast %arg5 : i32 to index
      %c0_9 = arith.constant 0 : index
      %21 = vector.load %arg3[%20, %c0_9] : memref<2x32xf32, #tpu.memory_space<vmem>>, vector<1x32xf32>
      %22 = vector.broadcast %17 : vector<16x1xf32> to vector<16x32xf32>
      %23 = arith.mulf %9, %22 : vector<16x32xf32>
      %24 = vector.broadcast %19 : vector<1x32xf32> to vector<16x32xf32>
      %25 = arith.mulf %23, %24 : vector<16x32xf32>
      %26 = vector.broadcast %21 : vector<1x32xf32> to vector<16x32xf32>
      %27 = arith.addf %25, %26 : vector<16x32xf32>
      scf.yield %27 : vector<16x32xf32>
    }
    %c2_i32_1 = arith.constant 2 : i32
    %c0_2 = arith.constant 0 : index
    %c0_3 = arith.constant 0 : index
    %3 = vector.load %arg4[%c0_2, %c0_3] : memref<16x32xf32, #tpu.memory_space<vmem>>, vector<16x32xf32>
    tpu.vector_store %arg4[%c0_2, %c0_3], %2 {strides = array<i32>} : memref<16x32xf32, #tpu.memory_space<vmem>>, vector<16x32xf32>,
    return
  }
  func.func @transform_0(%arg0: i32) -> (i32, i32) {
    %c0_i32 = arith.constant 0 : i32
    %c0_i32_0 = arith.constant 0 : i32
    return %arg0, %c0_i32 : i32, i32
  }
  func.func @transform_1(%arg0: i32) -> (i32, i32) {
    %c0_i32 = arith.constant 0 : i32
    %c0_i32_0 = arith.constant 0 : i32
    %c0_i32_1 = arith.constant 0 : i32
    return %c0_i32, %c0_i32_0 : i32, i32
  }
  func.func @transform_2(%arg0: i32) -> (i32, i32) {
    %c0_i32 = arith.constant 0 : i32
    %c0_i32_0 = arith.constant 0 : i32
    %c0_i32_1 = arith.constant 0 : i32
    return %c0_i32, %c0_i32_0 : i32, i32
  }
  func.func @transform_3(%arg0: i32) -> (i32, i32) {
    %c0_i32 = arith.constant 0 : i32
    %c0_i32_0 = arith.constant 0 : i32
    return %arg0, %c0_i32 : i32, i32
  }
}

</mosaic_0001>

<llo_original>
// kernel: tpu_custom_call.1
$region0: #{tpu_custom_call.1}
  #allocation0 [shape = 'u32[]', space=smem, size = 0x4, offset = 0x4, fixed_abs, tag = 'smem constant byte address 0x4 - core index']
  #allocation1 [shape = 'u32[144,128]{1,0:T(1,128)}', space=vmem, size = 0x12000, scoped, tag = 'internal scratch']
  %s0 = inlined_call_operand.hbm [shape: f32[16,32], index: 0, kind: input, shape index: {}, may-alias: {0,3}]
  %s1 = inlined_call_operand.vmem [shape: f32[2,32], index: 1, kind: input, shape index: {}]
  %s2 = inlined_call_operand.vmem [shape: f32[2,32], index: 2, kind: input, shape index: {}]
  %s3 = inlined_call_operand.hbm [shape: f32[16,32], index: 3, kind: output, shape index: {}, may-alias: {0,3}]
  %s4 = sld [smem:[#allocation0]]
  $region33: #{tpu_custom_call.1} parent=0
    _
  %s6 = ssub.s32 1, %s4
  %s7 = scalar_select 0, %s6, %s4
  $region1: #{tpu_custom_call.1} parent=0
    #allocation2 [shape = 'u8[8192]{0}', space=vmem, size = 0x2000, scoped, tag = 'input window, operand 0, single buffered']
    #allocation3 [shape = 's32[1]{0}', space=sflag, size = 0x4, scoped, tag = 'scoped memory for tpu_custom_call.1']
    #allocation4 [shape = 's32[1]{0}', space=sflag, size = 0x4, scoped, tag = 'scoped memory for tpu_custom_call.1']
    #allocation5 [shape = 'u8[8192]{0}', space=vmem, size = 0x2000, scoped, tag = 'output window, operand 0, single buffered']
    %8 = vsyncpa [#allocation3], 0
    %9 = vsyncpa [#allocation4], 0
    // Predicated region
    $region2: #{tpu_custom_call.1} parent=1 // pred_check
      _
    $region3: #{tpu_custom_call.1} parent=1 // pred_check_branch
      %11 = sbr.rel (0) target = $region5
    $region4: #{tpu_custom_call.1} parent=1 // pred_region
      %s13 = ssub.s32 256, 256
      %14 = vsyncadd [#allocation3], %s13
      %s15 = sshll.u32 [#allocation2], 4
      %s16 = int_to_ptr.vmem [resolvable:$true] %s15
      %21 = dma.hbm_to_vmem [thread:$0]  %s0, 256, %s16, [#allocation3], 128, 128, 8
    $region5: #{tpu_custom_call.1} parent=1 // pred_fallthru
      _
    // Predicated region
    $region6: #{tpu_custom_call.1} parent=1 // pred_check
      _
    $region7: #{tpu_custom_call.1} parent=1 // pred_check_branch
      %23 = sbr.rel (0) target = $region9
    $region8: #{tpu_custom_call.1} parent=1 // pred_region
      _
    $region9: #{tpu_custom_call.1} parent=1 // pred_fallthru
      _
    // Predicated region
    $region10: #{tpu_custom_call.1} parent=1 // pred_check
      _
    $region11: #{tpu_custom_call.1} parent=1 // pred_check_branch
      %25 = sbr.rel (0) target = $region13
    $region12: #{tpu_custom_call.1} parent=1 // pred_region
      _
    $region13: #{tpu_custom_call.1} parent=1 // pred_fallthru
      _
    // Predicated region
    $region14: #{tpu_custom_call.1} parent=1 // pred_check
      _
    $region15: #{tpu_custom_call.1} parent=1 // pred_check_branch
      %27 = sbr.rel (0) target = $region17
    $region16: #{tpu_custom_call.1} parent=1 // pred_region
      %28 = dma.done [#allocation3], 256
    $region17: #{tpu_custom_call.1} parent=1 // pred_fallthru
      _
    %v29 = vld [vmem:[#allocation2] sm:$0xff]
    %v30 = vld [vmem:[#allocation2 + $0x8] sm:$0xff]
    loop: start=0, step=1, limit=2
    $region18: #{tpu_custom_call.1} parent=1 // loop_pre_header
      _
    $region19: #{tpu_custom_call.1} parent=1 // loop_header
      %s32 = sphi 0, %s36
      %p33 = scmp.ge.s32.totalorder %s32, 2
      %v37 = vphi %v29, %v80
      %v38 = vphi %v30, %v81
    $region20: #{tpu_custom_call.1} parent=1 // loop_header_branch
      %35 = sbr.rel (%p33) target = $region24
    $region21: #{tpu_custom_call.1} parent=1 // loop_body
      %vm39 = vcmask 261120
      %v40 = vsel %vm39, %v37, 0.0
      %41 = vadd.xlane.f32.xlu0 %v40
      %v42 = vpop.xlane.xlu0 %41
      %v43 = vsel %vm39, %v38, 0.0
      %44 = vadd.xlane.f32.xlu0 %v43
      %v45 = vpop.xlane.xlu0 %44
      %v46 = vmul.f32 %v42, 0.03125
      %v47 = vmul.f32 %v45, 0.03125
      %v48 = vsub.f32 %v37, %v46
      %v49 = vsub.f32 %v38, %v47
      %v50 = vmul.f32 %v48, %v48
      %v51 = vmul.f32 %v49, %v49
      %v52 = vsel %vm39, %v50, 0.0
      %53 = vadd.xlane.f32.xlu0 %v52
      %v54 = vpop.xlane.xlu0 %53
      %v55 = vsel %vm39, %v51, 0.0
      %56 = vadd.xlane.f32.xlu0 %v55
      %v57 = vpop.xlane.xlu0 %56
      %v58 = vmul.f32 %v54, 0.03125
      %v59 = vmul.f32 %v57, 0.03125
      %v60 = vadd.f32 %v58, 1e-06
      %v61 = vadd.f32 %v59, 1e-06
      %v62 = vrsqrt.pop %v60
      %v63 = vrsqrt.pop %v61
      %s64 = scalar_lea.vmem %s1, %s32
      %v65 = vld [vmem:[%s64] sm:$0x1]
      %s66 = scalar_lea.vmem %s2, %s32
      %v67 = vld [vmem:[%s66] sm:$0x1]
      %v68 = vmul.f32 %v48, %v62
      %v69 = vmul.f32 %v49, %v63
      %v70 = vlaneseq
      %v71 = vshrl.u32 %v70, 7
      %v72 = vsub.s32 0, %v71
      %v73 = vrot.slane %v65, %v72
      %v74 = vmul.f32 %v68, %v73
      %v75 = vmul.f32 %v69, %v73
      %v76 = vlaneseq
      %v77 = vshrl.u32 %v76, 7
      %v78 = vsub.s32 0, %v77
      %v79 = vrot.slane %v67, %v78
      %v80 = vadd.f32 %v74, %v79
      %v81 = vadd.f32 %v75, %v79
    $region22: #{tpu_custom_call.1} parent=1 // loop_footer
      %s36 = sadd.s32 1, %s32
    $region23: #{tpu_custom_call.1} parent=1 // loop_footer_branch
      %31 = sbr.rel target = $region19
    $region24: #{tpu_custom_call.1} parent=1 // loop_exit
      _
    %vm82 = vcmask 261120
    %83 = vst.msk [vmem:[#allocation5] sm:$0xff] %vm82, %v37
    %84 = vst.msk [vmem:[#allocation5 + $0x8] sm:$0xff] %vm82, %v38
    // Predicated region
    $region25: #{tpu_custom_call.1} parent=1 // pred_check
      _
    $region26: #{tpu_custom_call.1} parent=1 // pred_check_branch
      %86 = sbr.rel (0) target = $region28
    $region27: #{tpu_custom_call.1} parent=1 // pred_region
      %s88 = ssub.s32 256, 256
      %89 = vsyncadd [#allocation4], %s88
      %s90 = sshll.u32 [#allocation5], 4
      %s91 = int_to_ptr.vmem [resolvable:$true] %s90
      %96 = dma.vmem_to_hbm [thread:$0]  %s91, 256, %s3, [#allocation4], 128, 128, 8
    $region28: #{tpu_custom_call.1} parent=1 // pred_fallthru
      _
    // Predicated region
    $region29: #{tpu_custom_call.1} parent=1 // pred_check
      _
    $region30: #{tpu_custom_call.1} parent=1 // pred_check_branch
      %98 = sbr.rel (0) target = $region32
    $region31: #{tpu_custom_call.1} parent=1 // pred_region
      %99 = dma.done [#allocation4], 256
    $region32: #{tpu_custom_call.1} parent=1 // pred_fallthru
      _
    %100 = vsyncpa [#allocation3], 1
    %101 = vsyncpa [#allocation4], 1

</llo_original>
